<compile_context>
chip_gen: v5e
topology: v5e:2x2
jax: 0.10.0
libtpu: 0.0.40
codegen_flags: <defaults>
</compile_context>

<pallas_src>
import functools

import jax
import jax.numpy as jnp
from jax.experimental import pallas as pl
from jax.experimental.pallas import tpu as pltpu

LANE = 128
SUBLANE = 8


def _round_up(x, m):
    return ((x + m - 1) // m) * m


def _pad2(a, rows, cols):
    """Pad a 2-D array with zeros up to (rows, cols); no-op copy elided."""
    r, c = a.shape
    if r == rows and c == cols:
        return a
    return jnp.pad(a, ((0, rows - r), (0, cols - c)))


def _vmem_capacity():
    try:
        return int(pltpu.get_tpu_info().vmem_capacity_bytes)
    except Exception:
        return 64 * 2**20  # conservative default: v7x per-TensorCore VMEM


# ----------------------------- fused kernel -------------------------------- #

def _make_fused_mlp_kernel(num_hidden):
    """Kernel refs: (x, w0, b0, w1, b1, ..., w_final, b_final, out)."""

    def kernel(*refs):
        x_ref = refs[0]
        o_ref = refs[-1]
        p_refs = refs[1:-1]

        h = x_ref[...]                                    # bf16 (TM, D0_pad)
        for i in range(num_hidden):
            w = p_refs[2 * i][...]                        # bf16 (Din_pad, Dout_pad)
            b = p_refs[2 * i + 1][...]                    # f32  (1, Dout_pad)
            y = jnp.dot(h, w, preferred_element_type=jnp.float32) + b
            h = jnp.maximum(y, 0.0).astype(jnp.bfloat16)  # ReLU, bf16 back into MXU
        w = p_refs[-2][...]
        b = p_refs[-1][...]
        y = jnp.dot(h, w, preferred_element_type=jnp.float32) + b
        o_ref[...] = y.astype(o_ref.dtype)

    return kernel


# ------------------- weight-streaming fallback (big layers) ----------------- #

def _matmul_bias_act_kernel(x_ref, w_ref, b_ref, o_ref, acc_ref, *, relu):
    @pl.when(pl.program_id(2) == 0)
    def _():
        acc_ref[...] = jnp.zeros_like(acc_ref)

    acc_ref[...] += jnp.dot(x_ref[...], w_ref[...], preferred_element_type=jnp.float32)

    @pl.when(pl.program_id(2) == pl.num_programs(2) - 1)
    def _():
        y = acc_ref[...] + b_ref[...]
        if relu:
            y = jnp.maximum(y, 0.0)
        o_ref[...] = y.astype(o_ref.dtype)


def _linear_streamed(x_p, w_p, b_p, *, relu, out_dtype, budget):
    """One Linear(+ReLU) with K/N-tiled weight streaming. Inputs already padded
    to (8,128)-aligned shapes; x_p/w_p bf16, b_p f32 (1, N)."""
    M, K = x_p.shape
    _, N = w_p.shape
    tm = min(M, 256)
    tk = min(K, 512)
    tn = min(N, 512)
    Mp, Kp, Np = _round_up(M, tm), _round_up(K, tk), _round_up(N, tn)
    x_p = _pad2(x_p, Mp, Kp)
    w_p = _pad2(w_p, Kp, Np)
    b_p = _pad2(b_p, 1, Np)

    grid = (Mp // tm, Np // tn, Kp // tk)
    flops = 2 * Mp * Kp * Np
    bytes_accessed = Mp * Kp * 2 + Kp * Np * 2 + Np * 4 + Mp * Np * jnp.dtype(out_dtype).itemsize

    out = pl.pallas_call(
        functools.partial(_matmul_bias_act_kernel, relu=relu),
        out_shape=jax.ShapeDtypeStruct((Mp, Np), out_dtype),
        grid=grid,
        in_specs=[
            pl.BlockSpec((tm, tk), lambda i, j, k: (i, k)),
            pl.BlockSpec((tk, tn), lambda i, j, k: (k, j)),
            pl.BlockSpec((1, tn), lambda i, j, k: (0, j)),
        ],
        out_specs=pl.BlockSpec((tm, tn), lambda i, j, k: (i, j)),
        scratch_shapes=[pltpu.VMEM((tm, tn), jnp.float32)],
        compiler_params=pltpu.CompilerParams(
            dimension_semantics=("parallel", "parallel", "arbitrary"),
            vmem_limit_bytes=int(budget),
        ),
        cost_estimate=pl.CostEstimate(
            flops=flops, transcendentals=0, bytes_accessed=bytes_accessed),
    )(x_p, w_p, b_p)
    return out[:M, :N]


# ----------------------------- wrapper -------------------------------------- #

def prepare_params(params):
    """Pad/cast all weights (bf16) and biases (f32) ONCE, outside the per-call path.
    Returns (weights_p, biases_p, dims) with dims a static tuple of original sizes."""
    layer_params = list(params["hidden"]) + [params["final"]]
    dims = tuple(int(w.shape[0]) for (w, _) in layer_params) + (
        int(layer_params[-1][0].shape[1]),)
    weights_p, biases_p = [], []
    for (w, b) in layer_params:
        d_in, d_out = int(w.shape[0]), int(w.shape[1])
        weights_p.append(_pad2(w.astype(jnp.bfloat16),
                               _round_up(d_in, LANE), _round_up(d_out, LANE)))
        biases_p.append(_pad2(b.astype(jnp.float32).reshape(1, -1),
                              1, _round_up(d_out, LANE)))
    return weights_p, biases_p, dims


def _choose_tm(B, dims_pad, budget, w_bytes, per_row):
    """Batch tile: fit the remaining-VMEM budget, prefer a grid of >= 2 steps so
    both v7x TensorCores get work, allow large tiles (up to 1024) on v5e/v6e."""
    avail = max(budget - w_bytes, SUBLANE * per_row)
    tm_cap = max(SUBLANE, (avail // per_row) // SUBLANE * SUBLANE)
    tm_cap = min(tm_cap, 1024)
    tm = min(tm_cap, max(SUBLANE, _round_up(pl.cdiv(B, 2), SUBLANE)))
    return int(tm)


def mlp_forward(weights_p, biases_p, dims, x):
    """weights_p/biases_p: pre-padded params from prepare_params; dims: static tuple.
    x: (B, C, H, W) f32. Returns (B, dims[-1]) f32."""
    B = x.shape[0]
    x_flat = x.reshape(B, -1)
    L = len(weights_p)
    dims_pad = [_round_up(d, LANE) for d in dims]

    cap = _vmem_capacity()
    budget = max(32 * 2**20, min(cap - 16 * 2**20, 96 * 2**20))

    # Single-buffered resident weight/bias bytes.
    w_bytes = sum(dims_pad[i] * dims_pad[i + 1] * 2 + dims_pad[i + 1] * 4
                  for i in range(L))
    # Per-row activation bytes: double-buffered bf16 input, double-buffered f32
    # output, plus live f32 intermediates for the widest layer.
    per_row = 2 * dims_pad[0] * 2 + 2 * dims_pad[-1] * 4 + 3 * max(dims_pad) * 4

    fused_fits = w_bytes + SUBLANE * per_row <= int(budget * 0.9)

    if not fused_fits:
        # Weight-streaming fallback: weights too big to keep resident (hits first
        # on v7x's 64 MiB VMEM); stream them layer by layer from HBM.
        B_pad = _round_up(B, SUBLANE)
        h = _pad2(x_flat.astype(jnp.bfloat16), B_pad, dims_pad[0])
        for li in range(L):
            last = li == L - 1
            h = _linear_streamed(
                h, weights_p[li], biases_p[li],
                relu=not last,
                out_dtype=jnp.float32 if last else jnp.bfloat16,
                budget=budget)
        return h[:B, :dims[-1]]

    # ----- fused path: one pallas_call, weights resident, activations in VMEM -----
    tm = _choose_tm(B, dims_pad, budget, w_bytes, per_row)
    B_pad = _round_up(B, tm)
    x_p = _pad2(x_flat.astype(jnp.bfloat16), B_pad, dims_pad[0])

    flat_inputs = [x_p]
    in_specs = [pl.BlockSpec((tm, dims_pad[0]), lambda i: (i, 0))]
    for li in range(L):
        d_in_p, d_out_p = dims_pad[li], dims_pad[li + 1]
        flat_inputs += [weights_p[li], biases_p[li]]
        in_specs += [
            # Constant index_map -> no re-fetch across grid steps; single buffer.
            pl.BlockSpec((d_in_p, d_out_p), lambda i: (0, 0),
                         pipeline_mode=pl.Buffered(1)),
            pl.BlockSpec((1, d_out_p), lambda i: (0, 0),
                         pipeline_mode=pl.Buffered(1)),
        ]
    out_spec = pl.BlockSpec((tm, dims_pad[-1]), lambda i: (i, 0))

    flops = 2 * B_pad * sum(dims_pad[i] * dims_pad[i + 1] for i in range(L))
    bytes_accessed = B_pad * dims_pad[0] * 2 + w_bytes + B_pad * dims_pad[-1] * 4

    out_p = pl.pallas_call(
        _make_fused_mlp_kernel(L - 1),
        out_shape=jax.ShapeDtypeStruct((B_pad, dims_pad[-1]), jnp.float32),
        grid=(B_pad // tm,),
        in_specs=in_specs,
        out_specs=out_spec,
        compiler_params=pltpu.CompilerParams(
            dimension_semantics=("parallel",),
            vmem_limit_bytes=int(budget),
        ),
        cost_estimate=pl.CostEstimate(
            flops=flops, transcendentals=0, bytes_accessed=bytes_accessed),
    )(*flat_inputs)

    return out_p[:B, :dims[-1]]


# ----------------------------- params / reference --------------------------- #

def init_params(key, layers_dim):
    """PyTorch-like Linear init; weights stored (in, out), bias (1, out), f32."""
    params = {"hidden": [], "final": None}
    for d1, d2 in zip(layers_dim[:-2], layers_dim[1:-1]):
        key, kw, kb = jax.random.split(key, 3)
        bound = 1.0 / jnp.sqrt(d1)
        w = jax.random.uniform(kw, (d1, d2), jnp.float32, -bound, bound)
        b = jax.random.uniform(kb, (1, d2), jnp.float32, -bound, bound)
        params["hidden"].append((w, b))
    d1, d2 = layers_dim[-2], layers_dim[-1]
    key, kw, kb = jax.random.split(key, 3)
    bound = 1.0 / jnp.sqrt(d1)
    w = jax.random.uniform(kw, (d1, d2), jnp.float32, -bound, bound)
    b = jax.random.uniform(kb, (1, d2), jnp.float32, -bound, bound)
    params["final"] = (w, b)
    return params


def mlp_reference(params, x):
    """Pure-JAX reference with the same bf16 weight/activation quantization."""
    B = x.shape[0]
    h = x.reshape(B, -1).astype(jnp.bfloat16)
    for (w, b) in params["hidden"]:
        y = jnp.dot(h, w.astype(jnp.bfloat16), preferred_element_type=jnp.float32) + b
        h = jnp.maximum(y, 0.0).astype(jnp.bfloat16)
    w, b = params["final"]
    return jnp.dot(h, w.astype(jnp.bfloat16), preferred_element_type=jnp.float32) + b


# ----------------------------- main ----------------------------------------- #

if __name__ == "__main__":
    key = jax.random.PRNGKey(0)
    kx, kp = jax.random.split(key)

    # Small shapes consistent with the module: x is NCHW, flattened dim = 4*8*8 = 256
    B, C, H, W = 2, 4, 8, 8
    layers_dim = [C * H * W, 128, 64, 32]

    x = jax.random.normal(kx, (B, C, H, W), jnp.float32)
    params = init_params(kp, layers_dim)

    # Padding/casting of weights happens once, outside the per-call path.
    weights_p, biases_p, dims = prepare_params(params)

    fwd = jax.jit(mlp_forward, static_argnums=(2,))
    out = fwd(weights_p, biases_p, dims, x)
    out = jax.block_until_ready(out)

    ref = mlp_reference(params, x)
    assert out.shape == (B, layers_dim[-1]), out.shape
    assert jnp.allclose(out, ref, atol=2e-2, rtol=2e-2), "mismatch vs reference"

    print("KERNEL_OK")
</pallas_src>

<mosaic_0001>
module attributes {stable_mosaic.version = 11 : i64} {
  func.func @kernel(%arg0: i32, %arg1: memref<8x256xbf16, #tpu.memory_space<vmem>>, %arg2: memref<256x128xbf16, #tpu.memory_space<vmem>>, %arg3: memref<1x128xf32, #tpu.memory_space<vmem>>, %arg4: memref<128x128xbf16, #tpu.memory_space<vmem>>, %arg5: memref<1x128xf32, #tpu.memory_space<vmem>>, %arg6: memref<128x128xbf16, #tpu.memory_space<vmem>>, %arg7: memref<1x128xf32, #tpu.memory_space<vmem>>, %arg8: memref<8x128xf32, #tpu.memory_space<vmem>>) attributes {dimension_semantics = [#tpu.dimension_semantics<parallel>], iteration_bounds = array<i64: 1>, scalar_prefetch = 0 : i64, scratch_operands = 0 : i64, tpu.core_type = #tpu.core_type<tc>, window_params = [{transform_indices = @transform_0, window_bounds = array<i64: 8, 256>}, {pipeline_mode = #tpu.pipeline_mode<synchronous>, transform_indices = @transform_1, window_bounds = array<i64: 256, 128>}, {pipeline_mode = #tpu.pipeline_mode<synchronous>, transform_indices = @transform_2, window_bounds = array<i64: 1, 128>}, {pipeline_mode = #tpu.pipeline_mode<synchronous>, transform_indices = @transform_3, window_bounds = array<i64: 128, 128>}, {pipeline_mode = #tpu.pipeline_mode<synchronous>, transform_indices = @transform_4, window_bounds = array<i64: 1, 128>}, {pipeline_mode = #tpu.pipeline_mode<synchronous>, transform_indices = @transform_5, window_bounds = array<i64: 128, 128>}, {pipeline_mode = #tpu.pipeline_mode<synchronous>, transform_indices = @transform_6, window_bounds = array<i64: 1, 128>}, {transform_indices = @transform_7, window_bounds = array<i64: 8, 128>}]} {
    %c0 = arith.constant 0 : index
    %c0_0 = arith.constant 0 : index
    %0 = vector.load %arg1[%c0, %c0_0] : memref<8x256xbf16, #tpu.memory_space<vmem>>, vector<8x256xbf16>
    %c0_1 = arith.constant 0 : index
    %c0_2 = arith.constant 0 : index
    %1 = vector.load %arg2[%c0_1, %c0_2] : memref<256x128xbf16, #tpu.memory_space<vmem>>, vector<256x128xbf16>
    %c0_3 = arith.constant 0 : index
    %c0_4 = arith.constant 0 : index
    %2 = vector.load %arg3[%c0_3, %c0_4] : memref<1x128xf32, #tpu.memory_space<vmem>>, vector<1x128xf32>
    %cst = arith.constant dense<0.000000e+00> : vector<8x128xf32>
    %3 = tpu.matmul %0, %1, %cst {dimension_numbers = #tpu.dot_dimension_numbers<[1], [0], [0], [1], [0, 0, 1, 1], [], []>} : vector<8x256xbf16>, vector<256x128xbf16>, vector<8x128xf32> -> vector<8x128xf32>
    %4 = vector.broadcast %2 : vector<1x128xf32> to vector<8x128xf32>
    %5 = arith.addf %3, %4 : vector<8x128xf32>
    %cst_5 = arith.constant 0.000000e+00 : f32
    %6 = vector.broadcast %cst_5 : f32 to vector<8x128xf32>
    %7 = arith.maximumf %5, %6 : vector<8x128xf32>
    %8 = arith.truncf %7 : vector<8x128xf32> to vector<8x128xbf16>
    %c0_6 = arith.constant 0 : index
    %c0_7 = arith.constant 0 : index
    %9 = vector.load %arg4[%c0_6, %c0_7] : memref<128x128xbf16, #tpu.memory_space<vmem>>, vector<128x128xbf16>
    %c0_8 = arith.constant 0 : index
    %c0_9 = arith.constant 0 : index
    %10 = vector.load %arg5[%c0_8, %c0_9] : memref<1x128xf32, #tpu.memory_space<vmem>>, vector<1x128xf32>
    %cst_10 = arith.constant dense<0.000000e+00> : vector<8x128xf32>
    %11 = tpu.matmul %8, %9, %cst_10 {dimension_numbers = #tpu.dot_dimension_numbers<[1], [0], [0], [1], [0, 0, 1, 1], [], []>} : vector<8x128xbf16>, vector<128x128xbf16>, vector<8x128xf32> -> vector<8x128xf32>
    %12 = vector.broadcast %10 : vector<1x128xf32> to vector<8x128xf32>
    %13 = arith.addf %11, %12 : vector<8x128xf32>
    %cst_11 = arith.constant 0.000000e+00 : f32
    %14 = vector.broadcast %cst_11 : f32 to vector<8x128xf32>
    %15 = arith.maximumf %13, %14 : vector<8x128xf32>
    %16 = arith.truncf %15 : vector<8x128xf32> to vector<8x128xbf16>
    %c0_12 = arith.constant 0 : index
    %c0_13 = arith.constant 0 : index
    %17 = vector.load %arg6[%c0_12, %c0_13] : memref<128x128xbf16, #tpu.memory_space<vmem>>, vector<128x128xbf16>
    %c0_14 = arith.constant 0 : index
    %c0_15 = arith.constant 0 : index
    %18 = vector.load %arg7[%c0_14, %c0_15] : memref<1x128xf32, #tpu.memory_space<vmem>>, vector<1x128xf32>
    %cst_16 = arith.constant dense<0.000000e+00> : vector<8x128xf32>
    %19 = tpu.matmul %16, %17, %cst_16 {dimension_numbers = #tpu.dot_dimension_numbers<[1], [0], [0], [1], [0, 0, 1, 1], [], []>} : vector<8x128xbf16>, vector<128x128xbf16>, vector<8x128xf32> -> vector<8x128xf32>
    %20 = vector.broadcast %18 : vector<1x128xf32> to vector<8x128xf32>
    %21 = arith.addf %19, %20 : vector<8x128xf32>
    %c0_17 = arith.constant 0 : index
    %c0_18 = arith.constant 0 : index
    %22 = vector.load %arg8[%c0_17, %c0_18] : memref<8x128xf32, #tpu.memory_space<vmem>>, vector<8x128xf32>
    tpu.vector_store %arg8[%c0_17, %c0_18], %21 {strides = array<i32>} : memref<8x128xf32, #tpu.memory_space<vmem>>, vector<8x128xf32>,
    return
  }
  func.func @transform_0(%arg0: i32) -> (i32, i32) {
    %c0_i32 = arith.constant 0 : i32
    %c0_i32_0 = arith.constant 0 : i32
    return %arg0, %c0_i32 : i32, i32
  }
  func.func @transform_1(%arg0: i32) -> (i32, i32) {
    %c0_i32 = arith.constant 0 : i32
    %c0_i32_0 = arith.constant 0 : i32
    %c0_i32_1 = arith.constant 0 : i32
    return %c0_i32, %c0_i32_0 : i32, i32
  }
  func.func @transform_2(%arg0: i32) -> (i32, i32) {
    %c0_i32 = arith.constant 0 : i32
    %c0_i32_0 = arith.constant 0 : i32
    %c0_i32_1 = arith.constant 0 : i32
    return %c0_i32, %c0_i32_0 : i32, i32
  }
  func.func @transform_3(%arg0: i32) -> (i32, i32) {
    %c0_i32 = arith.constant 0 : i32
    %c0_i32_0 = arith.constant 0 : i32
    %c0_i32_1 = arith.constant 0 : i32
    return %c0_i32, %c0_i32_0 : i32, i32
  }
  func.func @transform_4(%arg0: i32) -> (i32, i32) {
    %c0_i32 = arith.constant 0 : i32
    %c0_i32_0 = arith.constant 0 : i32
    %c0_i32_1 = arith.constant 0 : i32
    return %c0_i32, %c0_i32_0 : i32, i32
  }
  func.func @transform_5(%arg0: i32) -> (i32, i32) {
    %c0_i32 = arith.constant 0 : i32
    %c0_i32_0 = arith.constant 0 : i32
    %c0_i32_1 = arith.constant 0 : i32
    return %c0_i32, %c0_i32_0 : i32, i32
  }
  func.func @transform_6(%arg0: i32) -> (i32, i32) {
    %c0_i32 = arith.constant 0 : i32
    %c0_i32_0 = arith.constant 0 : i32
    %c0_i32_1 = arith.constant 0 : i32
    return %c0_i32, %c0_i32_0 : i32, i32
  }
  func.func @transform_7(%arg0: i32) -> (i32, i32) {
    %c0_i32 = arith.constant 0 : i32
    %c0_i32_0 = arith.constant 0 : i32
    return %arg0, %c0_i32 : i32, i32
  }
}

</mosaic_0001>

<llo_original>
// kernel: mlp_forward.1
$region0: #{mlp_forward.1}
  #allocation0 [shape = 'u32[]', space=smem, size = 0x4, offset = 0x4, fixed_abs, tag = 'smem constant byte address 0x4 - core index']
  #allocation1 [shape = 'u32[72,128]{1,0:T(1,128)}', space=vmem, size = 0x9000, scoped, tag = 'internal scratch']
  %s0 = inlined_call_operand.vmem [shape: bf16[8,256], index: 0, kind: input, shape index: {}]
  %s1 = inlined_call_operand.vmem [shape: bf16[256,128], index: 1, kind: input, shape index: {}]
  %s2 = inlined_call_operand.vmem [shape: f32[1,128], index: 2, kind: input, shape index: {}]
  %s3 = inlined_call_operand.hbm [shape: bf16[128,128], index: 3, kind: input, shape index: {}]
  %s4 = inlined_call_operand.vmem [shape: f32[1,128], index: 4, kind: input, shape index: {}]
  %s5 = inlined_call_operand.hbm [shape: bf16[128,128], index: 5, kind: input, shape index: {}]
  %s6 = inlined_call_operand.vmem [shape: f32[1,128], index: 6, kind: input, shape index: {}]
  %s7 = inlined_call_operand.vmem [shape: f32[8,128], index: 7, kind: output, shape index: {}]
  %s8 = sld [smem:[#allocation0]]
  $region46: #{mlp_forward.1} parent=0
    _
  %s10 = ssub.s32 1, %s8
  %s11 = scalar_select 0, %s10, %s8
  $region1: #{mlp_forward.1} parent=0
    #allocation2 [shape = 'u8[32768]{0}', space=vmem, size = 0x8000, scoped, tag = 'input window, operand 3, single buffered']
    #allocation3 [shape = 's32[1]{0}', space=sflag, size = 0x4, scoped, tag = 'scoped memory for mlp_forward.1']
    #allocation4 [shape = 'u8[32768]{0}', space=vmem, size = 0x8000, scoped, tag = 'input window, operand 5, single buffered']
    #allocation5 [shape = 's32[1]{0}', space=sflag, size = 0x4, scoped, tag = 'scoped memory for mlp_forward.1']
    %12 = vsyncpa [#allocation3], 0
    %13 = vsyncpa [#allocation5], 0
    // Predicated region
    $region2: #{mlp_forward.1} parent=1 // pred_check
      _
    $region3: #{mlp_forward.1} parent=1 // pred_check_branch
      %15 = sbr.rel (0) target = $region5
    $region4: #{mlp_forward.1} parent=1 // pred_region
      _
    $region5: #{mlp_forward.1} parent=1 // pred_fallthru
      _
    // Predicated region
    $region6: #{mlp_forward.1} parent=1 // pred_check
      _
    $region7: #{mlp_forward.1} parent=1 // pred_check_branch
      %17 = sbr.rel (0) target = $region9
    $region8: #{mlp_forward.1} parent=1 // pred_region
      _
    $region9: #{mlp_forward.1} parent=1 // pred_fallthru
      _
    // Predicated region
    $region10: #{mlp_forward.1} parent=1 // pred_check
      _
    $region11: #{mlp_forward.1} parent=1 // pred_check_branch
      %19 = sbr.rel (0) target = $region13
    $region12: #{mlp_forward.1} parent=1 // pred_region
      _
    $region13: #{mlp_forward.1} parent=1 // pred_fallthru
      _
    // Predicated region
    $region14: #{mlp_forward.1} parent=1 // pred_check
      _
    $region15: #{mlp_forward.1} parent=1 // pred_check_branch
      %21 = sbr.rel (0) target = $region17
    $region16: #{mlp_forward.1} parent=1 // pred_region
      %23 = vsyncadd [#allocation3], 0
      %s24 = sshll.u32 %s3, 4
      %s25 = int_to_ptr.hbm [resolvable:$true] %s24
      %s26 = sshll.u32 [#allocation2], 4
      %s27 = int_to_ptr.vmem [resolvable:$true] %s26
      %32 = dma.hbm_to_vmem [thread:$0]  %s25, 1024, %s27, [#allocation3], 64, 64, 4
    $region17: #{mlp_forward.1} parent=1 // pred_fallthru
      _
    // Predicated region
    $region18: #{mlp_forward.1} parent=1 // pred_check
      _
    $region19: #{mlp_forward.1} parent=1 // pred_check_branch
      %34 = sbr.rel (0) target = $region21
    $region20: #{mlp_forward.1} parent=1 // pred_region
      _
    $region21: #{mlp_forward.1} parent=1 // pred_fallthru
      _
    // Predicated region
    $region22: #{mlp_forward.1} parent=1 // pred_check
      _
    $region23: #{mlp_forward.1} parent=1 // pred_check_branch
      %36 = sbr.rel (0) target = $region25
    $region24: #{mlp_forward.1} parent=1 // pred_region
      %38 = vsyncadd [#allocation5], 0
      %s39 = sshll.u32 %s5, 4
      %s40 = int_to_ptr.hbm [resolvable:$true] %s39
      %s41 = sshll.u32 [#allocation4], 4
      %s42 = int_to_ptr.vmem [resolvable:$true] %s41
      %47 = dma.hbm_to_vmem [thread:$0]  %s40, 1024, %s42, [#allocation5], 64, 64, 4
    $region25: #{mlp_forward.1} parent=1 // pred_fallthru
      _
    // Predicated region
    $region26: #{mlp_forward.1} parent=1 // pred_check
      _
    $region27: #{mlp_forward.1} parent=1 // pred_check_branch
      %49 = sbr.rel (0) target = $region29
    $region28: #{mlp_forward.1} parent=1 // pred_region
      _
    $region29: #{mlp_forward.1} parent=1 // pred_fallthru
      _
    // Predicated region
    $region30: #{mlp_forward.1} parent=1 // pred_check
      _
    $region31: #{mlp_forward.1} parent=1 // pred_check_branch
      %51 = sbr.rel (0) target = $region33
    $region32: #{mlp_forward.1} parent=1 // pred_region
      %53 = dma.done [#allocation3], 1024
    $region33: #{mlp_forward.1} parent=1 // pred_fallthru
      _
    // Predicated region
    $region34: #{mlp_forward.1} parent=1 // pred_check
      _
    $region35: #{mlp_forward.1} parent=1 // pred_check_branch
      %55 = sbr.rel (0) target = $region37
    $region36: #{mlp_forward.1} parent=1 // pred_region
      %57 = dma.done [#allocation5], 1024
    $region37: #{mlp_forward.1} parent=1 // pred_fallthru
      _
    %v58 = vld [vmem:[%s0] sm:$0xff]
    %v59 = vld [vmem:[%s1] sm:$0xf]
    %v60 = vld [vmem:[%s1 + $0x4] sm:$0xf]
    %v61 = vld [vmem:[%s1 + $0x8] sm:$0xf]
    %v62 = vld [vmem:[%s1 + $0xc] sm:$0xf]
    %v63 = vld [vmem:[%s1 + $0x10] sm:$0xf]
    %v64 = vld [vmem:[%s1 + $0x14] sm:$0xf]
    %v65 = vld [vmem:[%s1 + $0x18] sm:$0xf]
    %v66 = vld [vmem:[%s1 + $0x1c] sm:$0xf]
    %v67 = vld [vmem:[%s1 + $0x20] sm:$0xf]
    %v68 = vld [vmem:[%s1 + $0x24] sm:$0xf]
    %v69 = vld [vmem:[%s1 + $0x28] sm:$0xf]
    %v70 = vld [vmem:[%s1 + $0x2c] sm:$0xf]
    %v71 = vld [vmem:[%s1 + $0x30] sm:$0xf]
    %v72 = vld [vmem:[%s1 + $0x34] sm:$0xf]
    %v73 = vld [vmem:[%s1 + $0x38] sm:$0xf]
    %v74 = vld [vmem:[%s1 + $0x3c] sm:$0xf]
    %v75 = vld [vmem:[%s1 + $0x40] sm:$0xf]
    %v76 = vld [vmem:[%s1 + $0x44] sm:$0xf]
    %v77 = vld [vmem:[%s1 + $0x48] sm:$0xf]
    %v78 = vld [vmem:[%s1 + $0x4c] sm:$0xf]
    %v79 = vld [vmem:[%s1 + $0x50] sm:$0xf]
    %v80 = vld [vmem:[%s1 + $0x54] sm:$0xf]
    %v81 = vld [vmem:[%s1 + $0x58] sm:$0xf]
    %v82 = vld [vmem:[%s1 + $0x5c] sm:$0xf]
    %v83 = vld [vmem:[%s1 + $0x60] sm:$0xf]
    %v84 = vld [vmem:[%s1 + $0x64] sm:$0xf]
    %v85 = vld [vmem:[%s1 + $0x68] sm:$0xf]
    %v86 = vld [vmem:[%s1 + $0x6c] sm:$0xf]
    %v87 = vld [vmem:[%s1 + $0x70] sm:$0xf]
    %v88 = vld [vmem:[%s1 + $0x74] sm:$0xf]
    %v89 = vld [vmem:[%s1 + $0x78] sm:$0xf]
    %v90 = vld [vmem:[%s1 + $0x7c] sm:$0xf]
    %v91 = vld [vmem:[%s2] sm:$0x1]
    %v93 = vperm.slane %v91, 0
    %v96 = vunpack.c.l.b16 %v58
    %v97 = vunpack.c.h.b16 %v58
    %v98 = vpack.c.b16 %v96, %v96
    %v99 = vpack.c.b16 %v97, %v97
    %v134 = vunpack.c.l.b16 %v59
    %v135 = vunpack.c.l.b16 %v60
    %v136 = vunpack.c.l.b16 %v61
    %v137 = vunpack.c.l.b16 %v62
    %v138 = vunpack.c.l.b16 %v63
    %v139 = vunpack.c.l.b16 %v64
    %v140 = vunpack.c.l.b16 %v65
    %v141 = vunpack.c.l.b16 %v66
    %v142 = vunpack.c.l.b16 %v67
    %v143 = vunpack.c.l.b16 %v68
    %v144 = vunpack.c.l.b16 %v69
    %v145 = vunpack.c.l.b16 %v70
    %v146 = vunpack.c.l.b16 %v71
    %v147 = vunpack.c.l.b16 %v72
    %v148 = vunpack.c.l.b16 %v73
    %v149 = vunpack.c.l.b16 %v74
    %v150 = vunpack.c.l.b16 %v75
    %v151 = vunpack.c.l.b16 %v76
    %v152 = vunpack.c.l.b16 %v77
    %v153 = vunpack.c.l.b16 %v78
    %v154 = vunpack.c.l.b16 %v79
    %v155 = vunpack.c.l.b16 %v80
    %v156 = vunpack.c.l.b16 %v81
    %v157 = vunpack.c.l.b16 %v82
    %v158 = vunpack.c.l.b16 %v83
    %v159 = vunpack.c.l.b16 %v84
    %v160 = vunpack.c.l.b16 %v85
    %v161 = vunpack.c.l.b16 %v86
    %v162 = vunpack.c.l.b16 %v87
    %v163 = vunpack.c.l.b16 %v88
    %v164 = vunpack.c.l.b16 %v89
    %v165 = vunpack.c.l.b16 %v90
    %v166 = vpack.c.b16 %v135, %v134
    %v167 = vpack.c.b16 %v137, %v136
    %v168 = vpack.c.b16 %v139, %v138
    %v169 = vpack.c.b16 %v141, %v140
    %v170 = vpack.c.b16 %v143, %v142
    %v171 = vpack.c.b16 %v145, %v144
    %v172 = vpack.c.b16 %v147, %v146
    %v173 = vpack.c.b16 %v149, %v148
    %v174 = vpack.c.b16 %v151, %v150
    %v175 = vpack.c.b16 %v153, %v152
    %v176 = vpack.c.b16 %v155, %v154
    %v177 = vpack.c.b16 %v157, %v156
    %v178 = vpack.c.b16 %v159, %v158
    %v179 = vpack.c.b16 %v161, %v160
    %v180 = vpack.c.b16 %v163, %v162
    %v181 = vpack.c.b16 %v165, %v164
    %198 = vmatpush.bf16.msra.mxu0 %v173
    %199 = vmatpush.bf16.msra.mxu0 %v172
    %200 = vmatpush.bf16.msra.mxu0 %v171
    %201 = vmatpush.bf16.msra.mxu0 %v170
    %202 = vmatpush.bf16.msra.mxu0 %v169
    %203 = vmatpush.bf16.msra.mxu0 %v168
    %204 = vmatpush.bf16.msra.mxu0 %v167
    %205 = vmatpush.bf16.msra.mxu0 %v166
    %206 = vmatmul.bf16.gmra.mxu0 %v98
    %v207 = vpop.f32.mrf.mxu0
    %v208 = vadd.f32 %v93, %v207
    %v209 = vpop.f32.mrf.mxu0
    %210 = vdwg.mxu0
    %211 = vmatpush.bf16.msra.mxu0 %v181
    %212 = vmatpush.bf16.msra.mxu0 %v180
    %213 = vmatpush.bf16.msra.mxu0 %v179
    %214 = vmatpush.bf16.msra.mxu0 %v178
    %215 = vmatpush.bf16.msra.mxu0 %v177
    %216 = vmatpush.bf16.msra.mxu0 %v176
    %217 = vmatpush.bf16.msra.mxu0 %v175
    %218 = vmatpush.bf16.msra.mxu0 %v174
    %219 = vmatmul.bf16.gmra.mxu0 %v99
    %v220 = vpop.f32.mrf.mxu0
    %v221 = vadd.f32 %v208, %v220
    %v222 = vpop.f32.mrf.mxu0
    %223 = vdwg.mxu0
    %v224 = vmax.f32 %v221, 0.0
    %v225 = vpack.c.bf16 %v224, %v224
    %v226 = vld [vmem:[#allocation2] sm:$0xf]
    %v227 = vld [vmem:[#allocation2 + $0x4] sm:$0xf]
    %v228 = vld [vmem:[#allocation2 + $0x8] sm:$0xf]
    %v229 = vld [vmem:[#allocation2 + $0xc] sm:$0xf]
    %v230 = vld [vmem:[#allocation2 + $0x10] sm:$0xf]
    %v231 = vld [vmem:[#allocation2 + $0x14] sm:$0xf]
    %v232 = vld [vmem:[#allocation2 + $0x18] sm:$0xf]
    %v233 = vld [vmem:[#allocation2 + $0x1c] sm:$0xf]
    %v234 = vld [vmem:[#allocation2 + $0x20] sm:$0xf]
    %v235 = vld [vmem:[#allocation2 + $0x24] sm:$0xf]
    %v236 = vld [vmem:[#allocation2 + $0x28] sm:$0xf]
    %v237 = vld [vmem:[#allocation2 + $0x2c] sm:$0xf]
    %v238 = vld [vmem:[#allocation2 + $0x30] sm:$0xf]
    %v239 = vld [vmem:[#allocation2 + $0x34] sm:$0xf]
    %v240 = vld [vmem:[#allocation2 + $0x38] sm:$0xf]
    %v241 = vld [vmem:[#allocation2 + $0x3c] sm:$0xf]
    %v242 = vld [vmem:[%s4] sm:$0x1]
    %v244 = vperm.slane %v242, 0
    %v262 = vunpack.c.l.b16 %v226
    %v263 = vunpack.c.l.b16 %v227
    %v264 = vunpack.c.l.b16 %v228
    %v265 = vunpack.c.l.b16 %v229
    %v266 = vunpack.c.l.b16 %v230
    %v267 = vunpack.c.l.b16 %v231
    %v268 = vunpack.c.l.b16 %v232
    %v269 = vunpack.c.l.b16 %v233
    %v270 = vunpack.c.l.b16 %v234
    %v271 = vunpack.c.l.b16 %v235
    %v272 = vunpack.c.l.b16 %v236
    %v273 = vunpack.c.l.b16 %v237
    %v274 = vunpack.c.l.b16 %v238
    %v275 = vunpack.c.l.b16 %v239
    %v276 = vunpack.c.l.b16 %v240
    %v277 = vunpack.c.l.b16 %v241
    %v278 = vpack.c.b16 %v263, %v262
    %v279 = vpack.c.b16 %v265, %v264
    %v280 = vpack.c.b16 %v267, %v266
    %v281 = vpack.c.b16 %v269, %v268
    %v282 = vpack.c.b16 %v271, %v270
    %v283 = vpack.c.b16 %v273, %v272
    %v284 = vpack.c.b16 %v275, %v274
    %v285 = vpack.c.b16 %v277, %v276
    %294 = vmatpush.bf16.msra.mxu0 %v285
    %295 = vmatpush.bf16.msra.mxu0 %v284
    %296 = vmatpush.bf16.msra.mxu0 %v283
    %297 = vmatpush.bf16.msra.mxu0 %v282
    %298 = vmatpush.bf16.msra.mxu0 %v281
    %299 = vmatpush.bf16.msra.mxu0 %v280
    %300 = vmatpush.bf16.msra.mxu0 %v279
    %301 = vmatpush.bf16.msra.mxu0 %v278
    %302 = vmatmul.bf16.gmra.mxu0 %v225
    %v303 = vpop.f32.mrf.mxu0
    %v304 = vadd.f32 %v244, %v303
    %v305 = vpop.f32.mrf.mxu0
    %306 = vdwg.mxu0
    %v307 = vmax.f32 %v304, 0.0
    %v308 = vpack.c.bf16 %v307, %v307
    %v309 = vld [vmem:[#allocation4] sm:$0xf]
    %v310 = vld [vmem:[#allocation4 + $0x4] sm:$0xf]
    %v311 = vld [vmem:[#allocation4 + $0x8] sm:$0xf]
    %v312 = vld [vmem:[#allocation4 + $0xc] sm:$0xf]
    %v313 = vld [vmem:[#allocation4 + $0x10] sm:$0xf]
    %v314 = vld [vmem:[#allocation4 + $0x14] sm:$0xf]
    %v315 = vld [vmem:[#allocation4 + $0x18] sm:$0xf]
    %v316 = vld [vmem:[#allocation4 + $0x1c] sm:$0xf]
    %v317 = vld [vmem:[#allocation4 + $0x20] sm:$0xf]
    %v318 = vld [vmem:[#allocation4 + $0x24] sm:$0xf]
    %v319 = vld [vmem:[#allocation4 + $0x28] sm:$0xf]
    %v320 = vld [vmem:[#allocation4 + $0x2c] sm:$0xf]
    %v321 = vld [vmem:[#allocation4 + $0x30] sm:$0xf]
    %v322 = vld [vmem:[#allocation4 + $0x34] sm:$0xf]
    %v323 = vld [vmem:[#allocation4 + $0x38] sm:$0xf]
    %v324 = vld [vmem:[#allocation4 + $0x3c] sm:$0xf]
    %v325 = vld [vmem:[%s6] sm:$0x1]
    %v327 = vperm.slane %v325, 0
    %v345 = vunpack.c.l.b16 %v309
    %v346 = vunpack.c.l.b16 %v310
    %v347 = vunpack.c.l.b16 %v311
    %v348 = vunpack.c.l.b16 %v312
    %v349 = vunpack.c.l.b16 %v313
    %v350 = vunpack.c.l.b16 %v314
    %v351 = vunpack.c.l.b16 %v315
    %v352 = vunpack.c.l.b16 %v316
    %v353 = vunpack.c.l.b16 %v317
    %v354 = vunpack.c.l.b16 %v318
    %v355 = vunpack.c.l.b16 %v319
    %v356 = vunpack.c.l.b16 %v320
    %v357 = vunpack.c.l.b16 %v321
    %v358 = vunpack.c.l.b16 %v322
    %v359 = vunpack.c.l.b16 %v323
    %v360 = vunpack.c.l.b16 %v324
    %v361 = vpack.c.b16 %v346, %v345
    %v362 = vpack.c.b16 %v348, %v347
    %v363 = vpack.c.b16 %v350, %v349
    %v364 = vpack.c.b16 %v352, %v351
    %v365 = vpack.c.b16 %v354, %v353
    %v366 = vpack.c.b16 %v356, %v355
    %v367 = vpack.c.b16 %v358, %v357
    %v368 = vpack.c.b16 %v360, %v359
    %377 = vmatpush.bf16.msra.mxu0 %v368
    %378 = vmatpush.bf16.msra.mxu0 %v367
    %379 = vmatpush.bf16.msra.mxu0 %v366
    %380 = vmatpush.bf16.msra.mxu0 %v365
    %381 = vmatpush.bf16.msra.mxu0 %v364
    %382 = vmatpush.bf16.msra.mxu0 %v363
    %383 = vmatpush.bf16.msra.mxu0 %v362
    %384 = vmatpush.bf16.msra.mxu0 %v361
    %385 = vmatmul.bf16.gmra.mxu0 %v308
    %v386 = vpop.f32.mrf.mxu0
    %v387 = vadd.f32 %v327, %v386
    %v388 = vpop.f32.mrf.mxu0
    %389 = vdwg.mxu0
    %390 = vst [vmem:[%s7] sm:$0xff] %v387
    // Predicated region
    $region38: #{mlp_forward.1} parent=1 // pred_check
      _
    $region39: #{mlp_forward.1} parent=1 // pred_check_branch
      %392 = sbr.rel (0) target = $region41
    $region40: #{mlp_forward.1} parent=1 // pred_region
      _
    $region41: #{mlp_forward.1} parent=1 // pred_fallthru
      _
    // Predicated region
    $region42: #{mlp_forward.1} parent=1 // pred_check
      _
    $region43: #{mlp_forward.1} parent=1 // pred_check_branch
      %394 = sbr.rel (0) target = $region45
    $region44: #{mlp_forward.1} parent=1 // pred_region
      _
    $region45: #{mlp_forward.1} parent=1 // pred_fallthru
      _
    %395 = vsyncpa [#allocation3], 1
    %396 = vsyncpa [#allocation5], 1

</llo_original>
